<compile_context>
chip_gen: v7x
topology: tpu7x:2x2x1
jax: 0.10.0
libtpu: 0.0.40
codegen_flags: <defaults>
</compile_context>

<pallas_src>
import functools

import jax
import jax.numpy as jnp
from jax import lax
from jax.experimental import pallas as pl
from jax.experimental.pallas import tpu as pltpu


def _fused_head_kernel(x_ref, w_ref, b_ref, lab_ref, logp_ref, stats_ref):
    """Fused 1x1-conv + log_softmax + NLL-loss + pixel-acc partials.

    x_ref    : (128, TM)        embedding columns (channels on sublanes)
    w_ref    : (NC, 128)        1x1 conv weight (PyTorch (out_ch, in_ch) layout)
    b_ref    : (NC, 1)          1x1 conv bias
    lab_ref  : (1, TM) int32    labels (-1 == ignore)
    logp_ref : (NC, TM)         output log-probabilities (pred_s, NCHW order)
    stats_ref: (8, 128) f32     per-batch resident accumulator:
                                row0 = nll partial sums, row1 = correct count,
                                row2 = valid-pixel count (lane-wise partials).
    """
    i = pl.program_id(1)

    @pl.when(i == 0)
    def _():
        stats_ref[...] = jnp.zeros_like(stats_ref)

    x = x_ref[...].astype(jnp.float32)          # (128, TM)
    w = w_ref[...].astype(jnp.float32)          # (NC, 128)
    bias = b_ref[...].astype(jnp.float32)       # (NC, 1)

    # 1x1 conv == matmul over channels (MXU); result already channel-major.
    logits = jnp.dot(w, x, preferred_element_type=jnp.float32) + bias   # (NC, TM)

    # log_softmax over the class (sublane) axis.
    m = jnp.max(logits, axis=0, keepdims=True)                          # (1, TM)
    z = logits - m
    lse = jnp.log(jnp.sum(jnp.exp(z), axis=0, keepdims=True))           # (1, TM)
    logp = z - lse                                                      # (NC, TM)
    logp_ref[...] = logp.astype(logp_ref.dtype)

    lab = lab_ref[...]                                                  # (1, TM)
    valid = lab >= 0

    nc, tm = logits.shape
    cls = lax.broadcasted_iota(jnp.int32, (nc, tm), 0)
    safe_lab = jnp.where(valid, lab, 0)
    onehot = cls == safe_lab                                            # (NC, TM)

    label_logit = jnp.sum(jnp.where(onehot, logits, 0.0), axis=0, keepdims=True)
    label_logp = jnp.sum(jnp.where(onehot, logp, 0.0), axis=0, keepdims=True)

    nll = jnp.where(valid, -label_logp, 0.0)                            # (1, TM)
    # argmax-free pixel accuracy: label is the argmax iff its logit equals the
    # row max.  TODO(synk): differs from torch.argmax only on exact float ties.
    correct = jnp.where(valid & (label_logit >= m), 1.0, 0.0)           # (1, TM)
    validf = valid.astype(jnp.float32)                                  # (1, TM)

    # Fold (1, TM) lane partials down to (1, 128) — slices land on vreg
    # boundaries, so this is just TM/128 - 1 cheap VALU adds per row.
    def fold(v):
        acc = v[:, 0:128]
        for k in range(1, tm // 128):
            acc = acc + v[:, k * 128:(k + 1) * 128]
        return acc

    stats_ref[0:1, :] += fold(nll)
    stats_ref[1:2, :] += fold(correct)
    stats_ref[2:3, :] += fold(validf)


def _pick_tile(hw, max_tile):
    """Largest lane tile <= max_tile that divides hw (multiple of 128)."""
    if hw <= max_tile:
        return hw
    t = (max_tile // 128) * 128
    while t >= 128:
        if hw % t == 0:
            return t
        t -= 128
    raise ValueError(f"H*W={hw} has no lane tile that is a multiple of 128")


@functools.partial(jax.jit, static_argnames=("num_class", "max_tile"))
def clipwarpnet_head(embs, labels, w, b, *, num_class, max_tile=2048):
    """embs: (B, 128, H, W) NCHW (f32 or bf16); labels: (B, 1, H, W) int32, -1=ignore.

    w: (num_class, 128) 1x1-conv weight (PyTorch (out_ch, in_ch) layout);
    b: (num_class, 1) bias.

    Returns (loss, acc, pred_s): NLLLoss(ignore_index=-1, reduction='mean'),
    SegmentationModuleBase.pixel_acc, and pred_s = log_softmax(last_layer(embs))
    in NCHW layout.
    """
    B, C, H, W = embs.shape
    assert C == 128, "ClipWarpNet fixes emb_dim = 128"
    HW = H * W
    # TODO(synk): ragged spatial sizes would need padding with label=-1.
    assert HW % 128 == 0, "H*W must be a multiple of 128"

    x = embs.reshape(B, C, HW)                       # free reshape, stays NCHW
    lab = labels.reshape(B, 1, HW).astype(jnp.int32)

    tile = _pick_tile(HW, max_tile)
    grid = (B, HW // tile)

    logp, stats = pl.pallas_call(
        _fused_head_kernel,
        out_shape=(
            jax.ShapeDtypeStruct((B, num_class, HW), jnp.float32),
            jax.ShapeDtypeStruct((B, 8, 128), jnp.float32),
        ),
        grid_spec=pltpu.PrefetchScalarGridSpec(
            num_scalar_prefetch=0,
            grid=grid,
            in_specs=[
                pl.BlockSpec((None, C, tile), lambda bi, i: (bi, 0, i)),
                pl.BlockSpec((num_class, C), lambda bi, i: (0, 0)),
                pl.BlockSpec((num_class, 1), lambda bi, i: (0, 0)),
                pl.BlockSpec((None, 1, tile), lambda bi, i: (bi, 0, i)),
            ],
            out_specs=[
                pl.BlockSpec((None, num_class, tile), lambda bi, i: (bi, 0, i)),
                pl.BlockSpec((None, 8, 128), lambda bi, i: (bi, 0, 0)),
            ],
        ),
        # Batch axis is parallel (v7x megacore shards it); spatial-tile axis is
        # the stats-accumulation (arbitrary) axis.  VMEM per step at tile=2048
        # is ~2 MiB, well under default scoped VMEM on v5e/v6e/v7x.
        compiler_params=pltpu.CompilerParams(
            dimension_semantics=("parallel", "arbitrary")),
    )(x, w, b, lab)

    loss_sum = jnp.sum(stats[:, 0, :])
    acc_sum = jnp.sum(stats[:, 1, :])
    pix_sum = jnp.sum(stats[:, 2, :])

    loss = loss_sum / jnp.maximum(pix_sum, 1.0)      # NLLLoss 'mean' over valid
    acc = acc_sum / (pix_sum + 1e-10)                # pixel_acc

    pred_s = logp.reshape(B, num_class, H, W)        # already NCHW, free reshape
    return loss, acc, pred_s


def _reference(embs, labels, w, b, num_class):
    """Pure-JAX reference for sanity checking."""
    B, C, H, W = embs.shape
    x = embs.astype(jnp.float32).reshape(B, C, H * W)
    logits = jnp.einsum("nc,bcm->bnm", w.astype(jnp.float32), x) + b[None, :, :]
    logp = jax.nn.log_softmax(logits, axis=1)
    lab = labels.reshape(B, H * W).astype(jnp.int32)
    valid = lab >= 0
    safe = jnp.where(valid, lab, 0)
    nll = -jnp.take_along_axis(logp, safe[:, None, :], axis=1)[:, 0, :]
    loss = jnp.sum(jnp.where(valid, nll, 0.0)) / jnp.maximum(jnp.sum(valid), 1)
    preds = jnp.argmax(logits, axis=1)
    acc = jnp.sum(valid & (preds == lab)) / (jnp.sum(valid) + 1e-10)
    pred_s = logp.reshape(B, num_class, H, W)
    return loss, acc, pred_s


if __name__ == "__main__":
    key = jax.random.PRNGKey(0)
    k_emb, k_lab, k_w, k_b = jax.random.split(key, 4)

    num_class = 8
    clip_num = 2                       # 2 clip frames + 1 current frame
    B = clip_num + 1
    H = W = 16
    emb_dim = 128                      # fixed by ClipWarpNet.__init__

    # clip_embs stand-in (decoder output embeddings), NCHW, bf16 to halve HBM traffic.
    embs = jax.random.normal(
        k_emb, (B, emb_dim, H, W), dtype=jnp.float32).astype(jnp.bfloat16)
    # seg labels, (B, 1, H, W) with -1 as ignore_index
    labels = jax.random.randint(
        k_lab, (B, 1, H, W), minval=-1, maxval=num_class, dtype=jnp.int32)

    # last_layer = Dropout2d(0.1) [identity at eval] + Conv2d(128, num_class, k=1)
    # (weights rounded to bf16-exact values so kernel/reference matmul paths agree)
    w = (jax.random.normal(k_w, (num_class, emb_dim), dtype=jnp.float32)
         * 0.05).astype(jnp.bfloat16).astype(jnp.float32)
    b = (jax.random.normal(k_b, (num_class, 1), dtype=jnp.float32)
         * 0.01).astype(jnp.bfloat16).astype(jnp.float32)

    loss, acc, pred_s = clipwarpnet_head(embs, labels, w, b, num_class=num_class)
    jax.block_until_ready((loss, acc, pred_s))

    ref_loss, ref_acc, ref_pred = _reference(embs, labels, w, b, num_class)
    assert pred_s.shape == (B, num_class, H, W), pred_s.shape
    assert jnp.allclose(loss, ref_loss, rtol=1e-5, atol=1e-5), (loss, ref_loss)
    assert jnp.allclose(acc, ref_acc, rtol=1e-5, atol=1e-5), (acc, ref_acc)
    assert jnp.allclose(pred_s, ref_pred, rtol=1e-4, atol=1e-4)

    print("KERNEL_OK")
</pallas_src>

<mosaic_0001>
module attributes {stable_mosaic.version = 11 : i64} {
  func.func @_fused_head_kernel(%arg0: i32, %arg1: i32, %arg2: memref<1x128x256xbf16, #tpu.memory_space<vmem>>, %arg3: memref<8x128xf32, #tpu.memory_space<vmem>>, %arg4: memref<8x1xf32, #tpu.memory_space<vmem>>, %arg5: memref<1x1x256xi32, #tpu.memory_space<vmem>>, %arg6: memref<1x8x256xf32, #tpu.memory_space<vmem>>, %arg7: memref<1x8x128xf32, #tpu.memory_space<vmem>>) attributes {dimension_semantics = [#tpu.dimension_semantics<parallel>, #tpu.dimension_semantics<arbitrary>], iteration_bounds = array<i64: 3, 1>, scalar_prefetch = 0 : i64, scratch_operands = 0 : i64, tpu.core_type = #tpu.core_type<tc>, window_params = [{transform_indices = @transform_0, window_bounds = array<i64: 1, 128, 256>}, {pipeline_mode = #tpu.pipeline_mode<synchronous>, transform_indices = @transform_1, window_bounds = array<i64: 8, 128>}, {pipeline_mode = #tpu.pipeline_mode<synchronous>, transform_indices = @transform_2, window_bounds = array<i64: 8, 1>}, {transform_indices = @transform_3, window_bounds = array<i64: 1, 1, 256>}, {transform_indices = @transform_4, window_bounds = array<i64: 1, 8, 256>}, {transform_indices = @transform_5, window_bounds = array<i64: 1, 8, 128>}]} {
    %c0_i32 = arith.constant 0 : i32
    %0 = arith.cmpi eq, %arg1, %c0_i32 : i32
    %1 = arith.extui %0 : i1 to i32
    %c0_i32_0 = arith.constant 0 : i32
    %2 = arith.cmpi ne, %1, %c0_i32_0 : i32
    scf.if %2 {
      %cst_41 = arith.constant 0.000000e+00 : f32
      %79 = vector.broadcast %cst_41 : f32 to vector<8x128xf32>
      %c0_42 = arith.constant 0 : index
      %c0_43 = arith.constant 0 : index
      %c0_44 = arith.constant 0 : index
      %80 = vector.load %arg7[%c0_42, %c0_43, %c0_44] : memref<1x8x128xf32, #tpu.memory_space<vmem>>, vector<1x8x128xf32>
      %81 = vector.shape_cast %80 : vector<1x8x128xf32> to vector<8x128xf32>
      %82 = vector.shape_cast %79 : vector<8x128xf32> to vector<1x8x128xf32>
      tpu.vector_store %arg7[%c0_42, %c0_43, %c0_44], %82 {strides = array<i32>} : memref<1x8x128xf32, #tpu.memory_space<vmem>>, vector<1x8x128xf32>,
    } else {
    }
    %c0 = arith.constant 0 : index
    %c0_1 = arith.constant 0 : index
    %c0_2 = arith.constant 0 : index
    %3 = vector.load %arg2[%c0, %c0_1, %c0_2] : memref<1x128x256xbf16, #tpu.memory_space<vmem>>, vector<1x128x256xbf16>
    %4 = vector.shape_cast %3 : vector<1x128x256xbf16> to vector<128x256xbf16>
    %5 = arith.extf %4 : vector<128x256xbf16> to vector<128x256xf32>
    %c0_3 = arith.constant 0 : index
    %c0_4 = arith.constant 0 : index
    %6 = vector.load %arg3[%c0_3, %c0_4] : memref<8x128xf32, #tpu.memory_space<vmem>>, vector<8x128xf32>
    %c0_5 = arith.constant 0 : index
    %c0_6 = arith.constant 0 : index
    %7 = vector.load %arg4[%c0_5, %c0_6] : memref<8x1xf32, #tpu.memory_space<vmem>>, vector<8x1xf32>
    %cst = arith.constant dense<0.000000e+00> : vector<8x256xf32>
    %8 = tpu.matmul %6, %5, %cst {dimension_numbers = #tpu.dot_dimension_numbers<[1], [0], [0], [1], [0, 0, 1, 1], [], []>} : vector<8x128xf32>, vector<128x256xf32>, vector<8x256xf32> -> vector<8x256xf32>
    %9 = vector.broadcast %7 : vector<8x1xf32> to vector<8x256xf32>
    %10 = arith.addf %8, %9 : vector<8x256xf32>
    %cst_7 = arith.constant dense<0xFF800000> : vector<256xf32>
    %11 = vector.multi_reduction <maximumf>, %10, %cst_7 [0] : vector<8x256xf32> to vector<256xf32>
    %12 = vector.shape_cast %11 : vector<256xf32> to vector<1x256xf32>
    %13 = vector.broadcast %12 : vector<1x256xf32> to vector<8x256xf32>
    %14 = arith.subf %10, %13 : vector<8x256xf32>
    %15 = math.exp %14 : vector<8x256xf32>
    %cst_8 = arith.constant dense<0.000000e+00> : vector<256xf32>
    %16 = vector.multi_reduction <add>, %15, %cst_8 [0] : vector<8x256xf32> to vector<256xf32>
    %17 = vector.shape_cast %16 : vector<256xf32> to vector<1x256xf32>
    %18 = math.log %17 : vector<1x256xf32>
    %19 = vector.broadcast %18 : vector<1x256xf32> to vector<8x256xf32>
    %20 = arith.subf %14, %19 : vector<8x256xf32>
    %c0_9 = arith.constant 0 : index
    %c0_10 = arith.constant 0 : index
    %c0_11 = arith.constant 0 : index
    %21 = vector.load %arg6[%c0_9, %c0_10, %c0_11] : memref<1x8x256xf32, #tpu.memory_space<vmem>>, vector<1x8x256xf32>
    %22 = vector.shape_cast %21 : vector<1x8x256xf32> to vector<8x256xf32>
    %23 = vector.shape_cast %20 : vector<8x256xf32> to vector<1x8x256xf32>
    tpu.vector_store %arg6[%c0_9, %c0_10, %c0_11], %23 {strides = array<i32>} : memref<1x8x256xf32, #tpu.memory_space<vmem>>, vector<1x8x256xf32>,
    %c0_12 = arith.constant 0 : index
    %c0_13 = arith.constant 0 : index
    %c0_14 = arith.constant 0 : index
    %24 = vector.load %arg5[%c0_12, %c0_13, %c0_14] : memref<1x1x256xi32, #tpu.memory_space<vmem>>, vector<1x1x256xi32>
    %25 = vector.shape_cast %24 : vector<1x1x256xi32> to vector<1x256xi32>
    %c0_i32_15 = arith.constant 0 : i32
    %26 = vector.broadcast %c0_i32_15 : i32 to vector<1x256xi32>
    %27 = arith.cmpi sge, %25, %26 : vector<1x256xi32>
    %28 = tpu.iota {dimensions = array<i32: 0>} : vector<8x256xi32>
    %c0_i32_16 = arith.constant 0 : i32
    %29 = vector.broadcast %c0_i32_16 : i32 to vector<1x256xi32>
    %30 = arith.select %27, %25, %29 : vector<1x256xi1>, vector<1x256xi32>
    %31 = vector.broadcast %30 : vector<1x256xi32> to vector<8x256xi32>
    %32 = arith.cmpi eq, %28, %31 : vector<8x256xi32>
    %cst_17 = arith.constant 0.000000e+00 : f32
    %33 = vector.broadcast %cst_17 : f32 to vector<8x256xf32>
    %34 = arith.select %32, %10, %33 : vector<8x256xi1>, vector<8x256xf32>
    %cst_18 = arith.constant dense<0.000000e+00> : vector<256xf32>
    %35 = vector.multi_reduction <add>, %34, %cst_18 [0] : vector<8x256xf32> to vector<256xf32>
    %36 = vector.shape_cast %35 : vector<256xf32> to vector<1x256xf32>
    %cst_19 = arith.constant 0.000000e+00 : f32
    %37 = vector.broadcast %cst_19 : f32 to vector<8x256xf32>
    %38 = arith.select %32, %20, %37 : vector<8x256xi1>, vector<8x256xf32>
    %cst_20 = arith.constant dense<0.000000e+00> : vector<256xf32>
    %39 = vector.multi_reduction <add>, %38, %cst_20 [0] : vector<8x256xf32> to vector<256xf32>
    %40 = vector.shape_cast %39 : vector<256xf32> to vector<1x256xf32>
    %cst_21 = arith.constant 0.000000e+00 : f32
    %41 = vector.broadcast %cst_21 : f32 to vector<1x256xf32>
    %42 = arith.subf %41, %40 : vector<1x256xf32>
    %cst_22 = arith.constant 0.000000e+00 : f32
    %43 = vector.broadcast %cst_22 : f32 to vector<1x256xf32>
    %44 = arith.select %27, %42, %43 : vector<1x256xi1>, vector<1x256xf32>
    %45 = arith.cmpf oge, %36, %12 : vector<1x256xf32>
    %46 = arith.andi %27, %45 : vector<1x256xi1>
    %cst_23 = arith.constant 1.000000e+00 : f32
    %cst_24 = arith.constant 0.000000e+00 : f32
    %47 = vector.broadcast %cst_23 : f32 to vector<1x256xf32>
    %48 = vector.broadcast %cst_24 : f32 to vector<1x256xf32>
    %49 = arith.select %46, %47, %48 : vector<1x256xi1>, vector<1x256xf32>
    %50 = arith.extui %27 : vector<1x256xi1> to vector<1x256xi32>
    %51 = arith.sitofp %50 : vector<1x256xi32> to vector<1x256xf32>
    %c0_25 = arith.constant 0 : index
    %c0_26 = arith.constant 0 : index
    %c0_27 = arith.constant 0 : index
    %52 = vector.load %arg7[%c0_25, %c0_26, %c0_27] : memref<1x8x128xf32, #tpu.memory_space<vmem>>, vector<1x1x128xf32>
    %53 = vector.shape_cast %52 : vector<1x1x128xf32> to vector<1x128xf32>
    %54 = vector.extract_strided_slice %44 {offsets = [0, 0], sizes = [1, 128], strides = [1, 1]} : vector<1x256xf32> to vector<1x128xf32>
    %55 = vector.extract_strided_slice %44 {offsets = [0, 128], sizes = [1, 128], strides = [1, 1]} : vector<1x256xf32> to vector<1x128xf32>
    %56 = arith.addf %54, %55 : vector<1x128xf32>
    %57 = arith.addf %53, %56 : vector<1x128xf32>
    %c0_28 = arith.constant 0 : index
    %c0_29 = arith.constant 0 : index
    %c0_30 = arith.constant 0 : index
    %58 = vector.load %arg7[%c0_28, %c0_29, %c0_30] : memref<1x8x128xf32, #tpu.memory_space<vmem>>, vector<1x1x128xf32>
    %59 = vector.shape_cast %58 : vector<1x1x128xf32> to vector<1x128xf32>
    %60 = vector.shape_cast %57 : vector<1x128xf32> to vector<1x1x128xf32>
    tpu.vector_store %arg7[%c0_28, %c0_29, %c0_30], %60 {strides = array<i32>} : memref<1x8x128xf32, #tpu.memory_space<vmem>>, vector<1x1x128xf32>,
    %c0_31 = arith.constant 0 : index
    %c1 = arith.constant 1 : index
    %c0_32 = arith.constant 0 : index
    %61 = vector.load %arg7[%c0_31, %c1, %c0_32] : memref<1x8x128xf32, #tpu.memory_space<vmem>>, vector<1x1x128xf32>
    %62 = vector.shape_cast %61 : vector<1x1x128xf32> to vector<1x128xf32>
    %63 = vector.extract_strided_slice %49 {offsets = [0, 0], sizes = [1, 128], strides = [1, 1]} : vector<1x256xf32> to vector<1x128xf32>
    %64 = vector.extract_strided_slice %49 {offsets = [0, 128], sizes = [1, 128], strides = [1, 1]} : vector<1x256xf32> to vector<1x128xf32>
    %65 = arith.addf %63, %64 : vector<1x128xf32>
    %66 = arith.addf %62, %65 : vector<1x128xf32>
    %c0_33 = arith.constant 0 : index
    %c1_34 = arith.constant 1 : index
    %c0_35 = arith.constant 0 : index
    %67 = vector.load %arg7[%c0_33, %c1_34, %c0_35] : memref<1x8x128xf32, #tpu.memory_space<vmem>>, vector<1x1x128xf32>
    %68 = vector.shape_cast %67 : vector<1x1x128xf32> to vector<1x128xf32>
    %69 = vector.shape_cast %66 : vector<1x128xf32> to vector<1x1x128xf32>
    tpu.vector_store %arg7[%c0_33, %c1_34, %c0_35], %69 {strides = array<i32>} : memref<1x8x128xf32, #tpu.memory_space<vmem>>, vector<1x1x128xf32>,
    %c0_36 = arith.constant 0 : index
    %c2 = arith.constant 2 : index
    %c0_37 = arith.constant 0 : index
    %70 = vector.load %arg7[%c0_36, %c2, %c0_37] : memref<1x8x128xf32, #tpu.memory_space<vmem>>, vector<1x1x128xf32>
    %71 = vector.shape_cast %70 : vector<1x1x128xf32> to vector<1x128xf32>
    %72 = vector.extract_strided_slice %51 {offsets = [0, 0], sizes = [1, 128], strides = [1, 1]} : vector<1x256xf32> to vector<1x128xf32>
    %73 = vector.extract_strided_slice %51 {offsets = [0, 128], sizes = [1, 128], strides = [1, 1]} : vector<1x256xf32> to vector<1x128xf32>
    %74 = arith.addf %72, %73 : vector<1x128xf32>
    %75 = arith.addf %71, %74 : vector<1x128xf32>
    %c0_38 = arith.constant 0 : index
    %c2_39 = arith.constant 2 : index
    %c0_40 = arith.constant 0 : index
    %76 = vector.load %arg7[%c0_38, %c2_39, %c0_40] : memref<1x8x128xf32, #tpu.memory_space<vmem>>, vector<1x1x128xf32>
    %77 = vector.shape_cast %76 : vector<1x1x128xf32> to vector<1x128xf32>
    %78 = vector.shape_cast %75 : vector<1x128xf32> to vector<1x1x128xf32>
    tpu.vector_store %arg7[%c0_38, %c2_39, %c0_40], %78 {strides = array<i32>} : memref<1x8x128xf32, #tpu.memory_space<vmem>>, vector<1x1x128xf32>,
    return
  }
  func.func @transform_0(%arg0: i32, %arg1: i32) -> (i32, i32, i32) {
    %c0_i32 = arith.constant 0 : i32
    %c0_i32_0 = arith.constant 0 : i32
    return %arg0, %c0_i32, %arg1 : i32, i32, i32
  }
  func.func @transform_1(%arg0: i32, %arg1: i32) -> (i32, i32) {
    %c0_i32 = arith.constant 0 : i32
    %c0_i32_0 = arith.constant 0 : i32
    %c0_i32_1 = arith.constant 0 : i32
    return %c0_i32, %c0_i32_0 : i32, i32
  }
  func.func @transform_2(%arg0: i32, %arg1: i32) -> (i32, i32) {
    %c0_i32 = arith.constant 0 : i32
    %c0_i32_0 = arith.constant 0 : i32
    %c0_i32_1 = arith.constant 0 : i32
    return %c0_i32, %c0_i32_0 : i32, i32
  }
  func.func @transform_3(%arg0: i32, %arg1: i32) -> (i32, i32, i32) {
    %c0_i32 = arith.constant 0 : i32
    %c0_i32_0 = arith.constant 0 : i32
    return %arg0, %c0_i32, %arg1 : i32, i32, i32
  }
  func.func @transform_4(%arg0: i32, %arg1: i32) -> (i32, i32, i32) {
    %c0_i32 = arith.constant 0 : i32
    %c0_i32_0 = arith.constant 0 : i32
    return %arg0, %c0_i32, %arg1 : i32, i32, i32
  }
  func.func @transform_5(%arg0: i32, %arg1: i32) -> (i32, i32, i32) {
    %c0_i32 = arith.constant 0 : i32
    %c0_i32_0 = arith.constant 0 : i32
    %c0_i32_1 = arith.constant 0 : i32
    return %arg0, %c0_i32, %c0_i32_0 : i32, i32, i32
  }
}

</mosaic_0001>

<llo_original>
// kernel: clipwarpnet_head.1
$region0: #{clipwarpnet_head.1}
  #allocation0 [shape = 'u32[]', space=smem, size = 0x4, offset = 0x4, fixed_abs, tag = 'smem constant byte address 0x4 - core index']
  #allocation1 [shape = 'u32[144,128]{1,0:T(1,128)}', space=vmem, size = 0x12000, scoped, tag = 'internal scratch']
  %s0 = inlined_call_operand.vmem [shape: bf16[3,128,256], index: 0, kind: input, shape index: {}]
  %s1 = inlined_call_operand.vmem [shape: f32[8,128], index: 1, kind: input, shape index: {}]
  %s2 = inlined_call_operand.vmem [shape: f32[8,1], index: 2, kind: input, shape index: {}]
  %s3 = inlined_call_operand.vmem [shape: s32[3,1,256], index: 3, kind: input, shape index: {}]
  %s4 = inlined_call_operand.vmem [shape: f32[3,8,256], index: 4, kind: output, shape index: {0}]
  %s5 = inlined_call_operand.vmem [shape: f32[3,8,128], index: 5, kind: output, shape index: {1}]
  %6 = xla_tuple %s4, %s5
  %s7 = sld [smem:[#allocation0]]
  $region61: #{clipwarpnet_head.1} parent=0
    _
  %s9 = ssub.s32 1, %s7
  %s10 = scalar_select 0, %s9, %s7
  loop: start=0, step=1, limit=5
  $region2: #{clipwarpnet_head.1} parent=0 // loop_pre_header
    _
  $region3: #{clipwarpnet_head.1} parent=0 // loop_header
    %s12 = sphi 0, %s16
    %p13 = scmp.ge.s32.totalorder %s12, 5
    %s19 = sphi 0, %s31
    %s20 = sphi 0, %s27
    %s21 = sphi 0, %s19
    %s22 = sphi 0, %s20
    %s23 = sphi 0, %s21
    %s24 = sphi 0, %s22
    %s36 = sphi 0, %s38
    %s39 = sphi 0, %s36
    %s40 = sphi 0, %s39
    %s56 = sphi 0, %s40
    %s60 = sphi 0, %s60
    %s62 = sphi 0, %s60
    %s63 = sphi 0, %s62
    %s77 = sphi 0, %s63
    %s81 = sphi 0, %s81
    %s83 = sphi 0, %s81
    %s84 = sphi 0, %s83
    %s98 = sphi 0, %s84
    %s106 = sphi 0, %s108
    %s109 = sphi 0, %s106
    %s110 = sphi 0, %s109
    %s126 = sphi 0, %s110
    %s134 = sphi 0, %s136
    %s137 = sphi 0, %s134
    %s138 = sphi 0, %s137
    %s154 = sphi 0, %s138
    %s160 = sphi 0, %s162
    %s163 = sphi 0, %s160
    %s164 = sphi 0, %s163
    %s180 = sphi 0, %s164
  $region4: #{clipwarpnet_head.1} parent=0 // loop_header_branch
    %15 = sbr.rel (%p13) target = $region8
  $region5: #{clipwarpnet_head.1} parent=0 // loop_body
    %s17 = ssub.s32 %s12, 1
    %s18 = ssub.s32 %s12, 2
    %s25 = sadd.s32 1, %s20
    %p26 = scmp.ge.s32.totalorder %s25, 1
    %s27 = scalar_select %p26, 0, %s25
    %s28 = sadd.s32 1, %s19
    %s29 = scalar_select %p26, %s28, %s19
    %p30 = scmp.ge.s32.totalorder %s29, 3
    %s31 = scalar_select %p30, 0, %s29
    %s32 = ssub.s32 %s19, %s31
    %s33 = ssub.s32 %s20, %s27
    %s34 = sor.u32 %s32, %s33
    %p35 = scmp.eq.s32.totalorder %s34, 0
    %s37 = sadd.s32 %s36, 1
    %s38 = scalar_select %p35, %s36, %s37
    %p41 = pneg %p35
    %p42 = scmp.eq.s32.totalorder %s12, 2
    %p43 = por %p41, %p42
    %p44 = scmp.ne.s32.totalorder %s36, %s39
    %p45 = scmp.eq.s32.totalorder %s12, 0
    %p46 = por %p44, %p45
    %p47 = scmp.ne.s32.totalorder %s36, %s39
    %p48 = scmp.eq.s32.totalorder %s17, 2
    %p49 = por %p47, %p48
    %p50 = scmp.ne.s32.totalorder %s39, %s40
    %p51 = scmp.eq.s32.totalorder %s17, 0
    %p52 = por %p50, %p51
    %p53 = scmp.ne.s32.totalorder %s39, %s40
    %p54 = scmp.eq.s32.totalorder %s18, 2
    %p55 = por %p53, %p54
    %p57 = scmp.ne.s32.totalorder %s40, %s56
    %p58 = scmp.eq.s32.totalorder %s18, 0
    %p59 = por %p57, %p58
    %s61 = sadd.s32 %s60, 1
    %p64 = scmp.eq.s32.totalorder %s12, 2
    %p65 = scmp.ne.s32.totalorder %s60, %s62
    %p66 = scmp.eq.s32.totalorder %s12, 0
    %p67 = por %p65, %p66
    %p68 = scmp.ne.s32.totalorder %s60, %s62
    %p69 = scmp.eq.s32.totalorder %s17, 2
    %p70 = por %p68, %p69
    %p71 = scmp.ne.s32.totalorder %s62, %s63
    %p72 = scmp.eq.s32.totalorder %s17, 0
    %p73 = por %p71, %p72
    %p74 = scmp.ne.s32.totalorder %s62, %s63
    %p75 = scmp.eq.s32.totalorder %s18, 2
    %p76 = por %p74, %p75
    %p78 = scmp.ne.s32.totalorder %s63, %s77
    %p79 = scmp.eq.s32.totalorder %s18, 0
    %p80 = por %p78, %p79
    %s82 = sadd.s32 %s81, 1
    %p85 = scmp.eq.s32.totalorder %s12, 2
    %p86 = scmp.ne.s32.totalorder %s81, %s83
    %p87 = scmp.eq.s32.totalorder %s12, 0
    %p88 = por %p86, %p87
    %p89 = scmp.ne.s32.totalorder %s81, %s83
    %p90 = scmp.eq.s32.totalorder %s17, 2
    %p91 = por %p89, %p90
    %p92 = scmp.ne.s32.totalorder %s83, %s84
    %p93 = scmp.eq.s32.totalorder %s17, 0
    %p94 = por %p92, %p93
    %p95 = scmp.ne.s32.totalorder %s83, %s84
    %p96 = scmp.eq.s32.totalorder %s18, 2
    %p97 = por %p95, %p96
    %p99 = scmp.ne.s32.totalorder %s84, %s98
    %p100 = scmp.eq.s32.totalorder %s18, 0
    %p101 = por %p99, %p100
    %s102 = ssub.s32 %s19, %s31
    %s103 = ssub.s32 %s20, %s27
    %s104 = sor.u32 %s102, %s103
    %p105 = scmp.eq.s32.totalorder %s104, 0
    %s107 = sadd.s32 %s106, 1
    %s108 = scalar_select %p105, %s106, %s107
    %p111 = pneg %p105
    %p112 = scmp.eq.s32.totalorder %s12, 2
    %p113 = por %p111, %p112
    %p114 = scmp.ne.s32.totalorder %s106, %s109
    %p115 = scmp.eq.s32.totalorder %s12, 0
    %p116 = por %p114, %p115
    %p117 = scmp.ne.s32.totalorder %s106, %s109
    %p118 = scmp.eq.s32.totalorder %s17, 2
    %p119 = por %p117, %p118
    %p120 = scmp.ne.s32.totalorder %s109, %s110
    %p121 = scmp.eq.s32.totalorder %s17, 0
    %p122 = por %p120, %p121
    %p123 = scmp.ne.s32.totalorder %s109, %s110
    %p124 = scmp.eq.s32.totalorder %s18, 2
    %p125 = por %p123, %p124
    %p127 = scmp.ne.s32.totalorder %s110, %s126
    %p128 = scmp.eq.s32.totalorder %s18, 0
    %p129 = por %p127, %p128
    %s130 = ssub.s32 %s19, %s31
    %s131 = ssub.s32 %s20, %s27
    %s132 = sor.u32 %s130, %s131
    %p133 = scmp.eq.s32.totalorder %s132, 0
    %s135 = sadd.s32 %s134, 1
    %s136 = scalar_select %p133, %s134, %s135
    %p139 = pneg %p133
    %p140 = scmp.eq.s32.totalorder %s12, 2
    %p141 = por %p139, %p140
    %p142 = scmp.ne.s32.totalorder %s134, %s137
    %p143 = scmp.eq.s32.totalorder %s12, 0
    %p144 = por %p142, %p143
    %p145 = scmp.ne.s32.totalorder %s134, %s137
    %p146 = scmp.eq.s32.totalorder %s17, 2
    %p147 = por %p145, %p146
    %p148 = scmp.ne.s32.totalorder %s137, %s138
    %p149 = scmp.eq.s32.totalorder %s17, 0
    %p150 = por %p148, %p149
    %p151 = scmp.ne.s32.totalorder %s137, %s138
    %p152 = scmp.eq.s32.totalorder %s18, 2
    %p153 = por %p151, %p152
    %p155 = scmp.ne.s32.totalorder %s138, %s154
    %p156 = scmp.eq.s32.totalorder %s18, 0
    %p157 = por %p155, %p156
    %s158 = ssub.s32 %s19, %s31
    %p159 = scmp.eq.s32.totalorder %s158, 0
    %s161 = sadd.s32 %s160, 1
    %s162 = scalar_select %p159, %s160, %s161
    %p165 = pneg %p159
    %p166 = scmp.eq.s32.totalorder %s12, 2
    %p167 = por %p165, %p166
    %p168 = scmp.ne.s32.totalorder %s160, %s163
    %p169 = scmp.eq.s32.totalorder %s12, 0
    %p170 = por %p168, %p169
    %p171 = scmp.ne.s32.totalorder %s160, %s163
    %p172 = scmp.eq.s32.totalorder %s17, 2
    %p173 = por %p171, %p172
    %p174 = scmp.ne.s32.totalorder %s163, %s164
    %p175 = scmp.eq.s32.totalorder %s17, 0
    %p176 = por %p174, %p175
    %p177 = scmp.ne.s32.totalorder %s163, %s164
    %p178 = scmp.eq.s32.totalorder %s18, 2
    %p179 = por %p177, %p178
    %p181 = scmp.ne.s32.totalorder %s164, %s180
    %p182 = scmp.eq.s32.totalorder %s18, 0
    %p183 = por %p181, %p182
    %p184 = scmp.le.s32.totalorder 1, %s12
    %p185 = scmp.lt.s32.totalorder %s12, 4
    %p186 = pnand %p184, %p185
    %p187 = pneg %p186
    // Predicated region
    $region9: #{clipwarpnet_head.1} parent=5 // pred_check
      _
    $region10: #{clipwarpnet_head.1} parent=5 // pred_check_branch
      %189 = sbr.rel (%p186) target = $region12
    $region11: #{clipwarpnet_head.1} parent=5 // pred_region
      %s190 = ssub.s32 %s12, 1
      // Predicated region
      $region13: #{clipwarpnet_head.1} parent=11 // pred_check
        %p191 = pneg %p73
      $region14: #{clipwarpnet_head.1} parent=11 // pred_check_branch
        %193 = sbr.rel (%p191) target = $region16
      $region15: #{clipwarpnet_head.1} parent=11 // pred_region
        _
      $region16: #{clipwarpnet_head.1} parent=11 // pred_fallthru
        _
      // Predicated region
      $region17: #{clipwarpnet_head.1} parent=11 // pred_check
        %p194 = pneg %p94
      $region18: #{clipwarpnet_head.1} parent=11 // pred_check_branch
        %196 = sbr.rel (%p194) target = $region20
      $region19: #{clipwarpnet_head.1} parent=11 // pred_region
        _
      $region20: #{clipwarpnet_head.1} parent=11 // pred_fallthru
        _
    $region12: #{clipwarpnet_head.1} parent=5 // pred_fallthru
      _
    %p197 = scmp.lt.s32.totalorder %s12, 3
    // Predicated region
    $region21: #{clipwarpnet_head.1} parent=5 // pred_check
      %p198 = pneg %p197
    $region22: #{clipwarpnet_head.1} parent=5 // pred_check_branch
      %200 = sbr.rel (%p198) target = $region24
    $region23: #{clipwarpnet_head.1} parent=5 // pred_region
      // Predicated region
      $region25: #{clipwarpnet_head.1} parent=23 // pred_check
        %p201 = pneg %p46
      $region26: #{clipwarpnet_head.1} parent=23 // pred_check_branch
        %203 = sbr.rel (%p201) target = $region28
      $region27: #{clipwarpnet_head.1} parent=23 // pred_region
        %s204 = smul.u32 2, %s20
        %p205 = scmp.lt.s32.totalorder %s19, 2
        %s206 = scalar_select %p205, %s19, 2
        %p207 = scmp.lt.s32.totalorder %s204, 1
        %s208 = scalar_select %p207, %s204, 1
        %s209 = smul.addr %s206, 32
        %s210 = sadd.s32 %s208, %s209
        %s211 = smul.addr %s210, 4
        %s212 = scalar_lea.vmem %s0, %s211
        %s213 = smul.u32 2, %s20
      $region28: #{clipwarpnet_head.1} parent=23 // pred_fallthru
        _
      // Predicated region
      $region29: #{clipwarpnet_head.1} parent=23 // pred_check
        %p214 = pneg %p116
      $region30: #{clipwarpnet_head.1} parent=23 // pred_check_branch
        %216 = sbr.rel (%p214) target = $region32
      $region31: #{clipwarpnet_head.1} parent=23 // pred_region
        %s217 = smul.u32 2, %s20
        %p218 = scmp.lt.s32.totalorder %s19, 2
        %s219 = scalar_select %p218, %s19, 2
        %p220 = scmp.lt.s32.totalorder %s217, 1
        %s221 = scalar_select %p220, %s217, 1
        %s222 = smul.addr %s219, 2
        %s223 = sadd.s32 %s221, %s222
        %s224 = scalar_lea.vmem %s3, %s223
        %s225 = smul.u32 2, %s20
      $region32: #{clipwarpnet_head.1} parent=23 // pred_fallthru
        _
    $region24: #{clipwarpnet_head.1} parent=5 // pred_fallthru
      _
    %p226 = scmp.le.s32.totalorder 1, %s12
    %p227 = scmp.lt.s32.totalorder %s12, 4
    %p228 = pnand %p226, %p227
    %p229 = pneg %p228
    // Predicated region
    $region33: #{clipwarpnet_head.1} parent=5 // pred_check
      _
    $region34: #{clipwarpnet_head.1} parent=5 // pred_check_branch
      %231 = sbr.rel (%p228) target = $region36
    $region35: #{clipwarpnet_head.1} parent=5 // pred_region
      %s232 = ssub.s32 %s12, 1
      %s233 = smul.u32 2, %s22
      %p234 = scmp.lt.s32.totalorder %s21, 2
      %s235 = scalar_select %p234, %s21, 2
      %p236 = scmp.lt.s32.totalorder %s233, 1
      %s237 = scalar_select %p236, %s233, 1
      %s238 = smul.addr %s235, 32
      %s239 = sadd.s32 %s237, %s238
      %s240 = smul.addr %s239, 4
      %s241 = scalar_lea.vmem %s0, %s240
      %p242 = pneg %p52
      %p243 = pneg %p49
      %p244 = pneg %p73
      %p245 = pneg %p70
      %p246 = pneg %p94
      %p247 = pneg %p91
      %s248 = smul.u32 2, %s22
      %p249 = scmp.lt.s32.totalorder %s21, 2
      %s250 = scalar_select %p249, %s21, 2
      %p251 = scmp.lt.s32.totalorder %s248, 1
      %s252 = scalar_select %p251, %s248, 1
      %s253 = smul.addr %s250, 2
      %s254 = sadd.s32 %s252, %s253
      %s255 = scalar_lea.vmem %s3, %s254
      %p256 = pneg %p122
      %p257 = pneg %p119
      %p258 = pneg %p150
      %p259 = pneg %p147
      %s260 = smul.u32 2, %s22
      %p261 = scmp.lt.s32.totalorder %s21, 2
      %s262 = scalar_select %p261, %s21, 2
      %p263 = scmp.lt.s32.totalorder %s260, 1
      %s264 = scalar_select %p263, %s260, 1
      %s265 = smul.addr %s262, 2
      %s266 = sadd.s32 %s264, %s265
      %s267 = smul.addr %s266, 8
      %s268 = scalar_lea.vmem %s4, %s267
      %p269 = pneg %p176
      %p270 = pneg %p173
      %p271 = scmp.lt.s32.totalorder %s21, 2
      %s272 = scalar_select %p271, %s21, 2
      %s273 = smul.addr %s272, 8
      %s274 = scalar_lea.vmem %s5, %s273
      %s275 = smul.u32 2, %s22
      %p276 = scmp.lt.s32.totalorder %s21, 2
      %s277 = scalar_select %p276, %s21, 2
      %p278 = scmp.lt.s32.totalorder %s275, 1
      %s279 = scalar_select %p278, %s275, 1
      %s280 = smul.addr %s277, 32
      %s281 = sadd.s32 %s279, %s280
      %s282 = smul.addr %s281, 4
      %s283 = scalar_lea.vmem %s0, %s282
      %s284 = smul.u32 2, %s22
      %s285 = smul.u32 2, %s22
      %p286 = scmp.lt.s32.totalorder %s21, 2
      %s287 = scalar_select %p286, %s21, 2
      %p288 = scmp.lt.s32.totalorder %s285, 1
      %s289 = scalar_select %p288, %s285, 1
      %s290 = smul.addr %s287, 2
      %s291 = sadd.s32 %s289, %s290
      %s292 = scalar_lea.vmem %s3, %s291
      %s293 = smul.u32 2, %s22
      %s294 = smul.u32 2, %s22
      %p295 = scmp.lt.s32.totalorder %s21, 2
      %s296 = scalar_select %p295, %s21, 2
      %p297 = scmp.lt.s32.totalorder %s294, 1
      %s298 = scalar_select %p297, %s294, 1
      %s299 = smul.addr %s296, 2
      %s300 = sadd.s32 %s298, %s299
      %s301 = smul.addr %s300, 8
      %s302 = scalar_lea.vmem %s4, %s301
      %s303 = smul.u32 2, %s22
      %p304 = scmp.lt.s32.totalorder %s21, 2
      %s305 = scalar_select %p304, %s21, 2
      %s306 = smul.addr %s305, 8
      %s307 = scalar_lea.vmem %s5, %s306
      %p308 = scmp.eq.s32.totalorder %s22, 0
      // Predicated region
      $region37: #{clipwarpnet_head.1} parent=35 // pred_check
        %p309 = pneg %p308
      $region38: #{clipwarpnet_head.1} parent=35 // pred_check_branch
        %311 = sbr.rel (%p309) target = $region40
      $region39: #{clipwarpnet_head.1} parent=35 // pred_region
        %312 = vst [vmem:[%s307] sm:$0xff] 0.0
      $region40: #{clipwarpnet_head.1} parent=35 // pred_fallthru
        _
      %v313 = vld [vmem:[%s283] sm:$0xff]
      %v314 = vld [vmem:[%s283 + $0x8] sm:$0xff]
      %v315 = vld [vmem:[%s283 + $0x10] sm:$0xff]
      %v316 = vld [vmem:[%s283 + $0x18] sm:$0xff]
      %v317 = vld [vmem:[%s283 + $0x20] sm:$0xff]
      %v318 = vld [vmem:[%s283 + $0x28] sm:$0xff]
      %v319 = vld [vmem:[%s283 + $0x30] sm:$0xff]
      %v320 = vld [vmem:[%s283 + $0x38] sm:$0xff]
      %v321 = vld [vmem:[%s283 + $0x40] sm:$0xff]
      %v322 = vld [vmem:[%s283 + $0x48] sm:$0xff]
      %v323 = vld [vmem:[%s283 + $0x50] sm:$0xff]
      %v324 = vld [vmem:[%s283 + $0x58] sm:$0xff]
      %v325 = vld [vmem:[%s283 + $0x60] sm:$0xff]
      %v326 = vld [vmem:[%s283 + $0x68] sm:$0xff]
      %v327 = vld [vmem:[%s283 + $0x70] sm:$0xff]
      %v328 = vld [vmem:[%s283 + $0x78] sm:$0xff]
      %v329 = vunpack.c.l.bf16 %v313
      %v330 = vunpack.c.h.bf16 %v313
      %v331 = vunpack.c.l.bf16 %v314
      %v332 = vunpack.c.h.bf16 %v314
      %v333 = vunpack.c.l.bf16 %v315
      %v334 = vunpack.c.h.bf16 %v315
      %v335 = vunpack.c.l.bf16 %v316
      %v336 = vunpack.c.h.bf16 %v316
      %v337 = vunpack.c.l.bf16 %v317
      %v338 = vunpack.c.h.bf16 %v317
      %v339 = vunpack.c.l.bf16 %v318
      %v340 = vunpack.c.h.bf16 %v318
      %v341 = vunpack.c.l.bf16 %v319
      %v342 = vunpack.c.h.bf16 %v319
      %v343 = vunpack.c.l.bf16 %v320
      %v344 = vunpack.c.h.bf16 %v320
      %v345 = vunpack.c.l.bf16 %v321
      %v346 = vunpack.c.h.bf16 %v321
      %v347 = vunpack.c.l.bf16 %v322
      %v348 = vunpack.c.h.bf16 %v322
      %v349 = vunpack.c.l.bf16 %v323
      %v350 = vunpack.c.h.bf16 %v323
      %v351 = vunpack.c.l.bf16 %v324
      %v352 = vunpack.c.h.bf16 %v324
      %v353 = vunpack.c.l.bf16 %v325
      %v354 = vunpack.c.h.bf16 %v325
      %v355 = vunpack.c.l.bf16 %v326
      %v356 = vunpack.c.h.bf16 %v326
      %v357 = vunpack.c.l.bf16 %v327
      %v358 = vunpack.c.h.bf16 %v327
      %v359 = vunpack.c.l.bf16 %v328
      %v360 = vunpack.c.h.bf16 %v328
      %v361 = vld [vmem:[%s1] sm:$0xff]
      %v362 = vld [vmem:[%s2] sm:$0xff]
      %364 = vset.pattern.permute.xlu0 0
      %365 = vperm.xlu0 %364, %v362
      %v366 = vpop.permute.xlu0 %365
      %368 = vmatprep.subr.mxu0 %v330
      %369 = vmatpush1.msra.mxu0 %v329
      %370 = vmatprep.subr.mxu0 %v332
      %371 = vmatpush1.msra.mxu0 %v331
      %372 = vmatprep.subr.mxu0 %v334
      %373 = vmatpush1.msra.mxu0 %v333
      %374 = vmatprep.subr.mxu0 %v336
      %375 = vmatpush1.msra.mxu0 %v335
      %376 = vmatprep.subr.mxu0 %v338
      %377 = vmatpush1.msra.mxu0 %v337
      %378 = vmatprep.subr.mxu0 %v340
      %379 = vmatpush1.msra.mxu0 %v339
      %380 = vmatprep.subr.mxu0 %v342
      %381 = vmatpush1.msra.mxu0 %v341
      %382 = vmatprep.subr.mxu0 %v344
      %383 = vmatpush1.msra.mxu0 %v343
      %384 = vmatprep.subr.mxu0 %v346
      %385 = vmatpush1.msra.mxu0 %v345
      %386 = vmatprep.subr.mxu0 %v348
      %387 = vmatpush1.msra.mxu0 %v347
      %388 = vmatprep.subr.mxu0 %v350
      %389 = vmatpush1.msra.mxu0 %v349
      %390 = vmatprep.subr.mxu0 %v352
      %391 = vmatpush1.msra.mxu0 %v351
      %392 = vmatprep.subr.mxu0 %v354
      %393 = vmatpush1.msra.mxu0 %v353
      %394 = vmatprep.subr.mxu0 %v356
      %395 = vmatpush1.msra.mxu0 %v355
      %396 = vmatprep.subr.mxu0 %v358
      %397 = vmatpush1.msra.mxu0 %v357
      %398 = vmatprep.subr.mxu0 %v360
      %399 = vmatpush1.msra.mxu0 %v359
      %400 = vmatprep.subr.mxu0 0.0
      %401 = vmatpush1.msra.mxu0 0.0
      %402 = vmatprep.subr.mxu0 0.0
      %403 = vmatpush1.msra.mxu0 0.0
      %404 = vmatprep.subr.mxu0 0.0
      %405 = vmatpush1.msra.mxu0 0.0
      %406 = vmatprep.subr.mxu0 0.0
      %407 = vmatpush1.msra.mxu0 0.0
      %408 = vmatprep.subr.mxu0 0.0
      %409 = vmatpush1.msra.mxu0 0.0
      %410 = vmatprep.subr.mxu0 0.0
      %411 = vmatpush1.msra.mxu0 0.0
      %412 = vmatprep.subr.mxu0 0.0
      %413 = vmatpush1.msra.mxu0 0.0
      %414 = vmatprep.subr.mxu0 0.0
      %415 = vmatpush1.msra.mxu0 0.0
      %416 = vmatprep.subr.mxu0 0.0
      %417 = vmatpush1.msra.mxu0 0.0
      %418 = vmatprep.subr.mxu0 0.0
      %419 = vmatpush1.msra.mxu0 0.0
      %420 = vmatprep.subr.mxu0 0.0
      %421 = vmatpush1.msra.mxu0 0.0
      %422 = vmatprep.subr.mxu0 0.0
      %423 = vmatpush1.msra.mxu0 0.0
      %424 = vmatprep.subr.mxu0 0.0
      %425 = vmatpush1.msra.mxu0 0.0
      %426 = vmatprep.subr.mxu0 0.0
      %427 = vmatpush1.msra.mxu0 0.0
      %428 = vmatprep.subr.mxu0 0.0
      %429 = vmatpush1.msra.mxu0 0.0
      %430 = vmatprep.subr.mxu0 0.0
      %431 = vmatpush1.msra.mxu0 0.0
      %432 = vmatprep.mubr.f32.mxu0 0.0
      %433 = vmatmul.mubr.f32.gmra.mrb[0].mxu0 %v361
      %v434 = vpop.f32.mrb[0].mxu0
      %v435 = vadd.f32 %v366, %v434
      %v436 = vpop.f32.mrb[0].mxu0
      %v437 = vadd.f32 %v366, %v436
      %438 = vdwg.mxu0
      %v439 = vrot.slane %v435, 4
      %v440 = vmax.f32 %v435, %v439
      %v441 = vrot.slane %v440, 2
      %v442 = vmax.f32 %v440, %v441
      %v443 = vrot.slane %v442, 1
      %v444 = vmax.f32 %v442, %v443
      %v445 = vrot.slane %v437, 4
      %v446 = vmax.f32 %v437, %v445
      %v447 = vrot.slane %v446, 2
      %v448 = vmax.f32 %v446, %v447
      %v449 = vrot.slane %v448, 1
      %v450 = vmax.f32 %v448, %v449
      %v451 = vsub.f32 %v435, %v444
      %v452 = vsub.f32 %v437, %v450
      %v453 = vmul.f32 %v451, 1.442695
      %v454 = vpow.pop %v453
      %v455 = vmul.f32 %v452, 1.442695
      %v456 = vpow.pop %v455
      %v457 = vrot.slane %v454, 4
      %v458 = vadd.f32 %v454, %v457
      %v459 = vrot.slane %v458, 2
      %v460 = vadd.f32 %v458, %v459
      %v461 = vrot.slane %v460, 1
      %v462 = vadd.f32 %v460, %v461
      %v463 = vrot.slane %v456, 4
      %v464 = vadd.f32 %v456, %v463
      %v465 = vrot.slane %v464, 2
      %v466 = vadd.f32 %v464, %v465
      %v467 = vrot.slane %v466, 1
      %v468 = vadd.f32 %v466, %v467
      %v469 = vlog2.pop %v462
      %v470 = vmul.f32 %v469, 0.6931472
      %v471 = vlog2.pop %v468
      %v472 = vmul.f32 %v471, 0.6931472
      %v473 = vsub.f32 %v451, %v470
      %v474 = vsub.f32 %v452, %v472
      %475 = vst [vmem:[%s302] sm:$0xff] %v473
      %476 = vst [vmem:[%s302 + $0x8] sm:$0xff] %v474
      %v477 = vld [vmem:[%s292] sm:$0x3]
      %vm478 = vcmp.ge.s32.totalorder %v477, 0
      %v479 = vlaneseq
      %v480 = vshrl.u32 %v479, 7
      %v481 = vsel %vm478, %v477, 0
      %v482 = vlaneseq
      %v483 = vshrl.u32 %v482, 7
      %v484 = vsub.s32 0, %v483
      %v485 = vrot.slane %v481, %v484
      %v486 = vlaneseq
      %v487 = vshrl.u32 %v486, 7
      %v488 = vsub.s32 1, %v487
      %v489 = vrot.slane %v481, %v488
      %vm490 = vcmp.eq.s32.totalorder %v480, %v485
      %vm491 = vcmp.eq.s32.totalorder %v480, %v489
      %v492 = vsel %vm490, %v435, 0.0
      %v493 = vsel %vm491, %v437, 0.0
      %v494 = vrot.slane %v492, 4
      %v495 = vadd.f32 %v492, %v494
      %v496 = vrot.slane %v495, 2
      %v497 = vadd.f32 %v495, %v496
      %v498 = vrot.slane %v497, 1
      %v499 = vadd.f32 %v497, %v498
      %v500 = vrot.slane %v493, 4
      %v501 = vadd.f32 %v493, %v500
      %v502 = vrot.slane %v501, 2
      %v503 = vadd.f32 %v501, %v502
      %v504 = vrot.slane %v503, 1
      %v505 = vadd.f32 %v503, %v504
      %v506 = vsel %vm490, %v473, 0.0
      %v507 = vsel %vm491, %v474, 0.0
      %v508 = vrot.slane %v506, 4
      %v509 = vadd.f32 %v506, %v508
      %v510 = vrot.slane %v509, 2
      %v511 = vadd.f32 %v509, %v510
      %v512 = vrot.slane %v511, 1
      %v513 = vadd.f32 %v511, %v512
      %v514 = vrot.slane %v507, 4
      %v515 = vadd.f32 %v507, %v514
      %v516 = vrot.slane %v515, 2
      %v517 = vadd.f32 %v515, %v516
      %v518 = vrot.slane %v517, 1
      %v519 = vadd.f32 %v517, %v518
      %v520 = vsub.f32 0.0, %v513
      %v521 = vsub.f32 0.0, %v519
      %v524 = vcombine.low %v520, %v521
      %v526 = vunpack.c.l.s4 1966171168
      %v527 = vunpack.c.0.s8 %v526
      %v528 = vlaneseq
      %v529 = vshrl.u32 %v528, 7
      %v530 = vsub.s32 %v527, %v529
      %v531 = vrot.slane %v524, %v530
      %v533 = vunpack.c.l.s4 1966171168
      %v534 = vunpack.c.0.s8 %v533
      %v535 = vlaneseq
      %v536 = vshrl.u32 %v535, 7
      %v537 = vsub.s32 %v534, %v536
      %v538 = vrot.slane %v531, %v537
      %v540 = vsel %vm478, %v538, 0.0
      %vm541 = vcmp.ge.f32.partialorder %v499, %v444
      %vm542 = vcmp.ge.f32.partialorder %v505, %v450
      %v543 = vsel %vm541, 1, 0
      %v544 = vsel %vm542, 1, 0
      %v545 = vcombine.low %v543, %v544
      %v547 = vunpack.c.l.s4 1966171168
      %v548 = vunpack.c.0.s8 %v547
      %v549 = vlaneseq
      %v550 = vshrl.u32 %v549, 7
      %v551 = vsub.s32 %v548, %v550
      %v552 = vrot.slane %v545, %v551
      %v554 = vunpack.c.l.s4 1966171168
      %v555 = vunpack.c.0.s8 %v554
      %v556 = vlaneseq
      %v557 = vshrl.u32 %v556, 7
      %v558 = vsub.s32 %v555, %v557
      %v559 = vrot.slane %v552, %v558
      %vm560 = vcmp.ne.s32.totalorder %v559, 0
      %vm561 = vmand %vm478, %vm560
      %v562 = vsel %vm561, 1.0, 0.0
      %v563 = vsel %vm478, 1, 0
      %v564 = vcvt.s32.f32 %v563
      %v565 = vld [vmem:[%s307] sm:$0x1]
      %v567 = vrot.slane %v540, 1
      %v569 = vadd.f32 %v540, %v567
      %v570 = vadd.f32 %v565, %v569
      %571 = vst [vmem:[%s307] sm:$0x1] %v570
      %v572 = vld [vmem:[%s307 + $0x1] sm:$0x1]
      %v574 = vrot.slane %v562, 1
      %v576 = vadd.f32 %v562, %v574
      %v577 = vadd.f32 %v572, %v576
      %578 = vst [vmem:[%s307 + $0x1] sm:$0x1] %v577
      %v579 = vld [vmem:[%s307 + $0x2] sm:$0x1]
      %v581 = vrot.slane %v564, 1
      %v583 = vadd.f32 %v564, %v581
      %v584 = vadd.f32 %v579, %v583
      %585 = vst [vmem:[%s307 + $0x2] sm:$0x1] %v584
      %s586 = smul.u32 2, %s22
      %p587 = scmp.lt.s32.totalorder %s21, 2
      %s588 = scalar_select %p587, %s21, 2
      %p589 = scmp.lt.s32.totalorder %s586, 1
      %s590 = scalar_select %p589, %s586, 1
      %s591 = smul.addr %s588, 2
      %s592 = sadd.s32 %s590, %s591
      %s593 = smul.addr %s592, 8
      %s594 = scalar_lea.vmem %s4, %s593
      %p595 = scmp.lt.s32.totalorder %s21, 2
      %s596 = scalar_select %p595, %s21, 2
      %s597 = smul.addr %s596, 8
      %s598 = scalar_lea.vmem %s5, %s597
      // Predicated region
      $region41: #{clipwarpnet_head.1} parent=35 // pred_check
        %p599 = pneg %p147
      $region42: #{clipwarpnet_head.1} parent=35 // pred_check_branch
        %601 = sbr.rel (%p599) target = $region44
      $region43: #{clipwarpnet_head.1} parent=35 // pred_region
        %s602 = smul.u32 2, %s22
      $region44: #{clipwarpnet_head.1} parent=35 // pred_fallthru
        _
      // Predicated region
      $region45: #{clipwarpnet_head.1} parent=35 // pred_check
        %p603 = pneg %p173
      $region46: #{clipwarpnet_head.1} parent=35 // pred_check_branch
        %605 = sbr.rel (%p603) target = $region48
      $region47: #{clipwarpnet_head.1} parent=35 // pred_region
        _
      $region48: #{clipwarpnet_head.1} parent=35 // pred_fallthru
        _
    $region36: #{clipwarpnet_head.1} parent=5 // pred_fallthru
      _
    %p606 = scmp.le.s32.totalorder 2, %s12
    // Predicated region
    $region49: #{clipwarpnet_head.1} parent=5 // pred_check
      %p607 = pneg %p606
    $region50: #{clipwarpnet_head.1} parent=5 // pred_check_branch
      %609 = sbr.rel (%p607) target = $region52
    $region51: #{clipwarpnet_head.1} parent=5 // pred_region
      %s610 = ssub.s32 %s12, 2
      // Predicated region
      $region53: #{clipwarpnet_head.1} parent=51 // pred_check
        %p611 = pneg %p153
      $region54: #{clipwarpnet_head.1} parent=51 // pred_check_branch
        %613 = sbr.rel (%p611) target = $region56
      $region55: #{clipwarpnet_head.1} parent=51 // pred_region
        %s614 = smul.u32 2, %s24
        %p615 = scmp.lt.s32.totalorder %s23, 2
        %s616 = scalar_select %p615, %s23, 2
        %p617 = scmp.lt.s32.totalorder %s614, 1
        %s618 = scalar_select %p617, %s614, 1
        %s619 = smul.addr %s616, 2
        %s620 = sadd.s32 %s618, %s619
        %s621 = smul.addr %s620, 8
        %s622 = scalar_lea.vmem %s4, %s621
      $region56: #{clipwarpnet_head.1} parent=51 // pred_fallthru
        _
      // Predicated region
      $region57: #{clipwarpnet_head.1} parent=51 // pred_check
        %p623 = pneg %p179
      $region58: #{clipwarpnet_head.1} parent=51 // pred_check_branch
        %625 = sbr.rel (%p623) target = $region60
      $region59: #{clipwarpnet_head.1} parent=51 // pred_region
        %p626 = scmp.lt.s32.totalorder %s23, 2
        %s627 = scalar_select %p626, %s23, 2
        %s628 = smul.addr %s627, 8
        %s629 = scalar_lea.vmem %s5, %s628
      $region60: #{clipwarpnet_head.1} parent=51 // pred_fallthru
        _
    $region52: #{clipwarpnet_head.1} parent=5 // pred_fallthru
      _
  $region6: #{clipwarpnet_head.1} parent=0 // loop_footer
    %s16 = sadd.s32 1, %s12
  $region7: #{clipwarpnet_head.1} parent=0 // loop_footer_branch
    %11 = sbr.rel target = $region3
  $region8: #{clipwarpnet_head.1} parent=0 // loop_exit
    _

</llo_original>
